<compile_context>
chip_gen: v7x
topology: tpu7x:2x2x1
jax: 0.10.0
libtpu: 0.0.40
codegen_flags: <defaults>
</compile_context>

<pallas_src>
import jax
import jax.numpy as jnp
from jax.experimental import pallas as pl
from jax.experimental.pallas import tpu as pltpu

EPS = 1e-5
CIN = 3
COUT = 8

# Lanes (f32 elements of the flattened padded-spatial axis) per grid step.
# Blocks per step: 2 x (1,3,64K) inputs = 1.5 MiB + (1,8,64K) output = 2 MiB;
# double-buffered ~7 MiB -> inside the default scoped VMEM on v5e (16 MiB),
# v6e (32 MiB) and v7x (32 MiB).  (131072 would also fit v6e/v7x but is
# borderline on v5e's default limit, so 65536 is the portable choice.)
MAX_TILE_M = 65536

# Lanes per in-kernel chunk: all intermediates of the elementwise chain are
# (8, 1024) f32 = 8 vregs each, so the whole chain stays in registers.
LANE_CHUNK = 1024


def _make_fused_kernel(tm, chunk=LANE_CHUNK):
    """Folded (1x1 conv + training-mode BN) for both branches + product.

    p_ref  : (COUT, 2*CIN+2) folded per-channel constants:
             [:, 0:CIN]          -> W1' (conv1 weight * bn1 scale)
             [:, CIN]            -> t1  (folded bias/mean shift, branch 1)
             [:, CIN+1:2*CIN+1]  -> W2'
             [:, 2*CIN+1]        -> t2
    x1_ref : (1, CIN, tm)  zero-padded input, channel-major, lane-dense
    x2_ref : (1, CIN, tm)
    o_ref  : (1, COUT, tm)
    """
    n_full, rem = divmod(tm, chunk)

    def kernel(p_ref, x1_ref, x2_ref, o_ref):
        p = p_ref[...]                                   # (8, 8), tiny
        w1c = [p[:, k:k + 1] for k in range(CIN)]        # (COUT,1) each
        w2c = [p[:, CIN + 1 + k:CIN + 2 + k] for k in range(CIN)]
        t1 = p[:, CIN:CIN + 1]
        t2 = p[:, 2 * CIN + 1:2 * CIN + 2]

        def do_chunk(c0, ch):
            # Register-resident chunk: load -> FMA chain -> single store.
            x1 = x1_ref[0, :, pl.ds(c0, ch)]             # (CIN, ch)
            x2 = x2_ref[0, :, pl.ds(c0, ch)]             # (CIN, ch)
            v1 = w1c[0] * x1[0:1, :]
            v2 = w2c[0] * x2[0:1, :]
            for k in range(1, CIN):
                v1 = v1 + w1c[k] * x1[k:k + 1, :]
                v2 = v2 + w2c[k] * x2[k:k + 1, :]
            o_ref[0, :, pl.ds(c0, ch)] = (v1 + t1) * (v2 + t2)

        if n_full > 0:
            if n_full <= 8:
                # Short fixed trip count: static unroll (LLO-visible).
                for i in range(n_full):
                    do_chunk(i * chunk, chunk)
            else:
                @pl.loop(0, n_full)
                def _(i):
                    do_chunk(pl.multiple_of(i * chunk, chunk), chunk)
        if rem:
            do_chunk(n_full * chunk, rem)

    return kernel


def _pad_flatten(x):
    """NCHW -> zero-pad H,W by 1 -> (N, C, Hp*Wp).  No transposes."""
    n, c, h, w = x.shape
    xp = jnp.pad(x, ((0, 0), (0, 0), (1, 1), (1, 1)))
    return xp.reshape(n, c, (h + 2) * (w + 2)), (h + 2, w + 2)


def _stats(x):
    """Per-channel sum (CIN,) and second moment (CIN,CIN) of the UNPADDED x.

    Zero padding contributes nothing to either sum, so statistics are taken
    on the original array.  Sum + gram are fused into a single gram by
    appending a ones-row:  g[:3,:3] = sum(x x^T),  g[:3,3] = sum(x).
    """
    n, c, h, w = x.shape
    xf = x.reshape(n, c, h * w)
    aug = jnp.concatenate([xf, jnp.ones((n, 1, h * w), xf.dtype)], axis=1)
    g = jnp.einsum('ncm,nkm->ck', aug, aug)              # (CIN+1, CIN+1)
    return g[:CIN, CIN], g[:CIN, :CIN]


def _fold_conv_bn(w, b, gamma, beta, s1, s2, m_tot):
    """Fold 1x1-conv bias + training-mode BN into per-channel (W', t).

    v = W x + b holds for every padded pixel (x == 0 on the border), so:
      mean_v = W mean_x + b
      var_v  = diag(W Cov(x) W^T)         (biased variance, as PyTorch BN)
    Note: m_tot counts the PADDED pixels (the zeros are part of the batch
    statistics even though they contribute nothing to the sums).
    """
    mean_x = s1 / m_tot                                  # (CIN,)
    cov_x = s2 / m_tot - jnp.outer(mean_x, mean_x)       # (CIN, CIN)
    mean_v = w @ mean_x + b                              # (COUT,)
    var_v = jnp.einsum('ck,kl,cl->c', w, cov_x, w)       # (COUT,)
    inv = gamma * jax.lax.rsqrt(var_v + EPS)
    return w * inv[:, None], (b - mean_v) * inv + beta


@jax.jit
def model_forward(x1, x2, params):
    (w1, b1, g1, be1, w2, b2, g2, be2) = params
    n = x1.shape[0]

    x1f, (hp, wp) = _pad_flatten(x1)
    x2f, _ = _pad_flatten(x2)
    mp = hp * wp
    m_tot = jnp.float32(n * mp)

    # Analytic-BN pre-pass on the unpadded originals (overlaps the pad).
    s1_1, s2_1 = _stats(x1)
    s1_2, s2_2 = _stats(x2)

    w1f, t1 = _fold_conv_bn(w1, b1, g1, be1, s1_1, s2_1, m_tot)
    w2f, t2 = _fold_conv_bn(w2, b2, g2, be2, s1_2, s2_2, m_tot)
    p = jnp.concatenate([w1f, t1[:, None], w2f, t2[:, None]], axis=1)  # (8, 8)

    # Lane-tile selection.  tm is either the full flattened extent (no
    # 128-alignment requirement) or a multiple of 128; the ragged last block
    # is handled by Pallas (no lane-pad copy, no output slice copy).
    if mp > MAX_TILE_M:
        tm = MAX_TILE_M
    else:
        tm = mp
        if n == 1 and mp > 128:
            # Guarantee >= 2 grid steps so both v7x TensorCores get work.
            tm = (((mp + 1) // 2) + 127) // 128 * 128

    grid = (n, pl.cdiv(mp, tm))

    out = pl.pallas_call(
        _make_fused_kernel(tm),
        out_shape=jax.ShapeDtypeStruct((n, COUT, mp), jnp.float32),
        grid=grid,
        in_specs=[
            pl.BlockSpec((COUT, 2 * CIN + 2), lambda i, j: (0, 0)),
            pl.BlockSpec((1, CIN, tm), lambda i, j: (i, 0, j)),
            pl.BlockSpec((1, CIN, tm), lambda i, j: (i, 0, j)),
        ],
        out_specs=pl.BlockSpec((1, COUT, tm), lambda i, j: (i, 0, j)),
        compiler_params=pltpu.CompilerParams(
            dimension_semantics=("parallel", "parallel")),
    )(p, x1f, x2f)

    return out.reshape(n, COUT, hp, wp)


def _reference(x1, x2, params):
    """Pure-jnp reference with explicit conv + training-mode BatchNorm."""
    (w1, b1, g1, be1, w2, b2, g2, be2) = params

    def branch(x, w, b, g, be):
        xp = jnp.pad(x, ((0, 0), (0, 0), (1, 1), (1, 1)))
        v = jnp.einsum('oc,nchw->nohw', w, xp) + b[None, :, None, None]
        m = v.mean(axis=(0, 2, 3), keepdims=True)
        var = jnp.mean((v - m) ** 2, axis=(0, 2, 3), keepdims=True)
        return ((v - m) * jax.lax.rsqrt(var + EPS) * g[None, :, None, None]
                + be[None, :, None, None])

    return branch(x1, w1, b1, g1, be1) * branch(x2, w2, b2, g2, be2)


def init_params(key):
    # Shapes match Conv2d(3, 8, 1) + BatchNorm2d(8) (default affine init).
    k1, k2, k3, k4 = jax.random.split(key, 4)
    w1 = jax.random.normal(k1, (COUT, CIN), jnp.float32) * 0.5
    b1 = jax.random.normal(k2, (COUT,), jnp.float32) * 0.1
    w2 = jax.random.normal(k3, (COUT, CIN), jnp.float32) * 0.5
    b2 = jax.random.normal(k4, (COUT,), jnp.float32) * 0.1
    g1 = jnp.ones((COUT,), jnp.float32)
    be1 = jnp.zeros((COUT,), jnp.float32)
    g2 = jnp.ones((COUT,), jnp.float32)
    be2 = jnp.zeros((COUT,), jnp.float32)
    return (w1, b1, g1, be1, w2, b2, g2, be2)


if __name__ == "__main__":
    key = jax.random.PRNGKey(0)
    kx1, kx2, kp = jax.random.split(key, 3)

    # Small shapes consistent with the module (Cin=3 is fixed by the conv).
    N, C, H, W = 2, 3, 16, 16
    x1 = jax.random.normal(kx1, (N, C, H, W), jnp.float32)
    x2 = jax.random.normal(kx2, (N, C, H, W), jnp.float32)
    params = init_params(kp)

    out = model_forward(x1, x2, params)
    jax.block_until_ready(out)
    assert out.shape == (N, COUT, H + 2, W + 2)

    ref = _reference(x1, x2, params)
    err = float(jnp.max(jnp.abs(out - ref)))
    assert jnp.allclose(out, ref, rtol=2e-3, atol=2e-3), err
    print("KERNEL_OK")
</pallas_src>

<mosaic_0001>
module attributes {stable_mosaic.version = 11 : i64} {
  func.func @kernel(%arg0: i32, %arg1: i32, %arg2: memref<8x8xf32, #tpu.memory_space<vmem>>, %arg3: memref<1x3x324xf32, #tpu.memory_space<vmem>>, %arg4: memref<1x3x324xf32, #tpu.memory_space<vmem>>, %arg5: memref<1x8x324xf32, #tpu.memory_space<vmem>>) attributes {dimension_semantics = [#tpu.dimension_semantics<parallel>, #tpu.dimension_semantics<parallel>], iteration_bounds = array<i64: 2, 1>, scalar_prefetch = 0 : i64, scratch_operands = 0 : i64, tpu.core_type = #tpu.core_type<tc>, window_params = [{pipeline_mode = #tpu.pipeline_mode<synchronous>, transform_indices = @transform_0, window_bounds = array<i64: 8, 8>}, {transform_indices = @transform_1, window_bounds = array<i64: 1, 3, 324>}, {transform_indices = @transform_2, window_bounds = array<i64: 1, 3, 324>}, {transform_indices = @transform_3, window_bounds = array<i64: 1, 8, 324>}]} {
    %c0 = arith.constant 0 : index
    %c0_0 = arith.constant 0 : index
    %0 = vector.load %arg2[%c0, %c0_0] : memref<8x8xf32, #tpu.memory_space<vmem>>, vector<8x8xf32>
    %1 = vector.extract_strided_slice %0 {offsets = [0, 0], sizes = [8, 1], strides = [1, 1]} : vector<8x8xf32> to vector<8x1xf32>
    %2 = vector.extract_strided_slice %0 {offsets = [0, 1], sizes = [8, 1], strides = [1, 1]} : vector<8x8xf32> to vector<8x1xf32>
    %3 = vector.extract_strided_slice %0 {offsets = [0, 2], sizes = [8, 1], strides = [1, 1]} : vector<8x8xf32> to vector<8x1xf32>
    %4 = vector.extract_strided_slice %0 {offsets = [0, 4], sizes = [8, 1], strides = [1, 1]} : vector<8x8xf32> to vector<8x1xf32>
    %5 = vector.extract_strided_slice %0 {offsets = [0, 5], sizes = [8, 1], strides = [1, 1]} : vector<8x8xf32> to vector<8x1xf32>
    %6 = vector.extract_strided_slice %0 {offsets = [0, 6], sizes = [8, 1], strides = [1, 1]} : vector<8x8xf32> to vector<8x1xf32>
    %7 = vector.extract_strided_slice %0 {offsets = [0, 3], sizes = [8, 1], strides = [1, 1]} : vector<8x8xf32> to vector<8x1xf32>
    %8 = vector.extract_strided_slice %0 {offsets = [0, 7], sizes = [8, 1], strides = [1, 1]} : vector<8x8xf32> to vector<8x1xf32>
    %c0_1 = arith.constant 0 : index
    %c0_2 = arith.constant 0 : index
    %c0_3 = arith.constant 0 : index
    %9 = vector.load %arg3[%c0_1, %c0_2, %c0_3] : memref<1x3x324xf32, #tpu.memory_space<vmem>>, vector<1x3x324xf32>
    %10 = vector.shape_cast %9 : vector<1x3x324xf32> to vector<3x324xf32>
    %c0_4 = arith.constant 0 : index
    %c0_5 = arith.constant 0 : index
    %c0_6 = arith.constant 0 : index
    %11 = vector.load %arg4[%c0_4, %c0_5, %c0_6] : memref<1x3x324xf32, #tpu.memory_space<vmem>>, vector<1x3x324xf32>
    %12 = vector.shape_cast %11 : vector<1x3x324xf32> to vector<3x324xf32>
    %13 = vector.extract_strided_slice %10 {offsets = [0, 0], sizes = [1, 324], strides = [1, 1]} : vector<3x324xf32> to vector<1x324xf32>
    %14 = vector.broadcast %1 : vector<8x1xf32> to vector<8x324xf32>
    %15 = vector.broadcast %13 : vector<1x324xf32> to vector<8x324xf32>
    %16 = arith.mulf %14, %15 : vector<8x324xf32>
    %17 = vector.extract_strided_slice %12 {offsets = [0, 0], sizes = [1, 324], strides = [1, 1]} : vector<3x324xf32> to vector<1x324xf32>
    %18 = vector.broadcast %4 : vector<8x1xf32> to vector<8x324xf32>
    %19 = vector.broadcast %17 : vector<1x324xf32> to vector<8x324xf32>
    %20 = arith.mulf %18, %19 : vector<8x324xf32>
    %21 = vector.extract_strided_slice %10 {offsets = [1, 0], sizes = [1, 324], strides = [1, 1]} : vector<3x324xf32> to vector<1x324xf32>
    %22 = vector.broadcast %2 : vector<8x1xf32> to vector<8x324xf32>
    %23 = vector.broadcast %21 : vector<1x324xf32> to vector<8x324xf32>
    %24 = arith.mulf %22, %23 : vector<8x324xf32>
    %25 = arith.addf %16, %24 : vector<8x324xf32>
    %26 = vector.extract_strided_slice %12 {offsets = [1, 0], sizes = [1, 324], strides = [1, 1]} : vector<3x324xf32> to vector<1x324xf32>
    %27 = vector.broadcast %5 : vector<8x1xf32> to vector<8x324xf32>
    %28 = vector.broadcast %26 : vector<1x324xf32> to vector<8x324xf32>
    %29 = arith.mulf %27, %28 : vector<8x324xf32>
    %30 = arith.addf %20, %29 : vector<8x324xf32>
    %31 = vector.extract_strided_slice %10 {offsets = [2, 0], sizes = [1, 324], strides = [1, 1]} : vector<3x324xf32> to vector<1x324xf32>
    %32 = vector.broadcast %3 : vector<8x1xf32> to vector<8x324xf32>
    %33 = vector.broadcast %31 : vector<1x324xf32> to vector<8x324xf32>
    %34 = arith.mulf %32, %33 : vector<8x324xf32>
    %35 = arith.addf %25, %34 : vector<8x324xf32>
    %36 = vector.extract_strided_slice %12 {offsets = [2, 0], sizes = [1, 324], strides = [1, 1]} : vector<3x324xf32> to vector<1x324xf32>
    %37 = vector.broadcast %6 : vector<8x1xf32> to vector<8x324xf32>
    %38 = vector.broadcast %36 : vector<1x324xf32> to vector<8x324xf32>
    %39 = arith.mulf %37, %38 : vector<8x324xf32>
    %40 = arith.addf %30, %39 : vector<8x324xf32>
    %41 = vector.broadcast %7 : vector<8x1xf32> to vector<8x324xf32>
    %42 = arith.addf %35, %41 : vector<8x324xf32>
    %43 = vector.broadcast %8 : vector<8x1xf32> to vector<8x324xf32>
    %44 = arith.addf %40, %43 : vector<8x324xf32>
    %45 = arith.mulf %42, %44 : vector<8x324xf32>
    %c0_7 = arith.constant 0 : index
    %c0_8 = arith.constant 0 : index
    %c0_9 = arith.constant 0 : index
    %46 = vector.load %arg5[%c0_7, %c0_8, %c0_9] : memref<1x8x324xf32, #tpu.memory_space<vmem>>, vector<1x8x324xf32>
    %47 = vector.shape_cast %46 : vector<1x8x324xf32> to vector<8x324xf32>
    %48 = vector.shape_cast %45 : vector<8x324xf32> to vector<1x8x324xf32>
    tpu.vector_store %arg5[%c0_7, %c0_8, %c0_9], %48 {strides = array<i32>} : memref<1x8x324xf32, #tpu.memory_space<vmem>>, vector<1x8x324xf32>,
    return
  }
  func.func @transform_0(%arg0: i32, %arg1: i32) -> (i32, i32) {
    %c0_i32 = arith.constant 0 : i32
    %c0_i32_0 = arith.constant 0 : i32
    %c0_i32_1 = arith.constant 0 : i32
    return %c0_i32, %c0_i32_0 : i32, i32
  }
  func.func @transform_1(%arg0: i32, %arg1: i32) -> (i32, i32, i32) {
    %c0_i32 = arith.constant 0 : i32
    %c0_i32_0 = arith.constant 0 : i32
    return %arg0, %c0_i32, %arg1 : i32, i32, i32
  }
  func.func @transform_2(%arg0: i32, %arg1: i32) -> (i32, i32, i32) {
    %c0_i32 = arith.constant 0 : i32
    %c0_i32_0 = arith.constant 0 : i32
    return %arg0, %c0_i32, %arg1 : i32, i32, i32
  }
  func.func @transform_3(%arg0: i32, %arg1: i32) -> (i32, i32, i32) {
    %c0_i32 = arith.constant 0 : i32
    %c0_i32_0 = arith.constant 0 : i32
    return %arg0, %c0_i32, %arg1 : i32, i32, i32
  }
}

</mosaic_0001>

<llo_original>
// kernel: model_forward.1
$region0: #{model_forward.1}
  #allocation0 [shape = 'u32[]', space=smem, size = 0x4, offset = 0x4, fixed_abs, tag = 'smem constant byte address 0x4 - core index']
  #allocation1 [shape = 'u32[144,128]{1,0:T(1,128)}', space=vmem, size = 0x12000, scoped, tag = 'internal scratch']
  %s0 = inlined_call_operand.vmem [shape: f32[8,8], index: 0, kind: input, shape index: {}]
  %s1 = inlined_call_operand.vmem [shape: f32[2,3,324], index: 1, kind: input, shape index: {}]
  %s2 = inlined_call_operand.vmem [shape: f32[2,3,324], index: 2, kind: input, shape index: {}]
  %s3 = inlined_call_operand.vmem [shape: f32[2,8,324], index: 3, kind: output, shape index: {}]
  %s4 = sld [smem:[#allocation0]]
  $region45: #{model_forward.1} parent=0
    _
  %s6 = ssub.s32 1, %s4
  %s7 = scalar_select 0, %s6, %s4
  loop: start=0, step=1, limit=4
  $region2: #{model_forward.1} parent=0 // loop_pre_header
    _
  $region3: #{model_forward.1} parent=0 // loop_header
    %s9 = sphi 0, %s13
    %p10 = scmp.ge.s32.totalorder %s9, 4
    %s16 = sphi 0, %s28
    %s17 = sphi 0, %s24
    %s18 = sphi 0, %s16
    %s19 = sphi 0, %s17
    %s20 = sphi 0, %s18
    %s21 = sphi 0, %s19
    %s29 = sphi 0, %s29
    %s31 = sphi 0, %s29
    %s32 = sphi 0, %s31
    %s46 = sphi 0, %s32
    %s54 = sphi 0, %s56
    %s57 = sphi 0, %s54
    %s58 = sphi 0, %s57
    %s74 = sphi 0, %s58
    %s82 = sphi 0, %s84
    %s85 = sphi 0, %s82
    %s86 = sphi 0, %s85
    %s102 = sphi 0, %s86
    %s110 = sphi 0, %s112
    %s113 = sphi 0, %s110
    %s114 = sphi 0, %s113
    %s130 = sphi 0, %s114
  $region4: #{model_forward.1} parent=0 // loop_header_branch
    %12 = sbr.rel (%p10) target = $region8
  $region5: #{model_forward.1} parent=0 // loop_body
    %s14 = ssub.s32 %s9, 1
    %s15 = ssub.s32 %s9, 2
    %s22 = sadd.s32 1, %s17
    %p23 = scmp.ge.s32.totalorder %s22, 1
    %s24 = scalar_select %p23, 0, %s22
    %s25 = sadd.s32 1, %s16
    %s26 = scalar_select %p23, %s25, %s16
    %p27 = scmp.ge.s32.totalorder %s26, 2
    %s28 = scalar_select %p27, 0, %s26
    %s30 = sadd.s32 %s29, 1
    %p33 = scmp.eq.s32.totalorder %s9, 1
    %p34 = scmp.ne.s32.totalorder %s29, %s31
    %p35 = scmp.eq.s32.totalorder %s9, 0
    %p36 = por %p34, %p35
    %p37 = scmp.ne.s32.totalorder %s29, %s31
    %p38 = scmp.eq.s32.totalorder %s14, 1
    %p39 = por %p37, %p38
    %p40 = scmp.ne.s32.totalorder %s31, %s32
    %p41 = scmp.eq.s32.totalorder %s14, 0
    %p42 = por %p40, %p41
    %p43 = scmp.ne.s32.totalorder %s31, %s32
    %p44 = scmp.eq.s32.totalorder %s15, 1
    %p45 = por %p43, %p44
    %p47 = scmp.ne.s32.totalorder %s32, %s46
    %p48 = scmp.eq.s32.totalorder %s15, 0
    %p49 = por %p47, %p48
    %s50 = ssub.s32 %s16, %s28
    %s51 = ssub.s32 %s17, %s24
    %s52 = sor.u32 %s50, %s51
    %p53 = scmp.eq.s32.totalorder %s52, 0
    %s55 = sadd.s32 %s54, 1
    %s56 = scalar_select %p53, %s54, %s55
    %p59 = pneg %p53
    %p60 = scmp.eq.s32.totalorder %s9, 1
    %p61 = por %p59, %p60
    %p62 = scmp.ne.s32.totalorder %s54, %s57
    %p63 = scmp.eq.s32.totalorder %s9, 0
    %p64 = por %p62, %p63
    %p65 = scmp.ne.s32.totalorder %s54, %s57
    %p66 = scmp.eq.s32.totalorder %s14, 1
    %p67 = por %p65, %p66
    %p68 = scmp.ne.s32.totalorder %s57, %s58
    %p69 = scmp.eq.s32.totalorder %s14, 0
    %p70 = por %p68, %p69
    %p71 = scmp.ne.s32.totalorder %s57, %s58
    %p72 = scmp.eq.s32.totalorder %s15, 1
    %p73 = por %p71, %p72
    %p75 = scmp.ne.s32.totalorder %s58, %s74
    %p76 = scmp.eq.s32.totalorder %s15, 0
    %p77 = por %p75, %p76
    %s78 = ssub.s32 %s16, %s28
    %s79 = ssub.s32 %s17, %s24
    %s80 = sor.u32 %s78, %s79
    %p81 = scmp.eq.s32.totalorder %s80, 0
    %s83 = sadd.s32 %s82, 1
    %s84 = scalar_select %p81, %s82, %s83
    %p87 = pneg %p81
    %p88 = scmp.eq.s32.totalorder %s9, 1
    %p89 = por %p87, %p88
    %p90 = scmp.ne.s32.totalorder %s82, %s85
    %p91 = scmp.eq.s32.totalorder %s9, 0
    %p92 = por %p90, %p91
    %p93 = scmp.ne.s32.totalorder %s82, %s85
    %p94 = scmp.eq.s32.totalorder %s14, 1
    %p95 = por %p93, %p94
    %p96 = scmp.ne.s32.totalorder %s85, %s86
    %p97 = scmp.eq.s32.totalorder %s14, 0
    %p98 = por %p96, %p97
    %p99 = scmp.ne.s32.totalorder %s85, %s86
    %p100 = scmp.eq.s32.totalorder %s15, 1
    %p101 = por %p99, %p100
    %p103 = scmp.ne.s32.totalorder %s86, %s102
    %p104 = scmp.eq.s32.totalorder %s15, 0
    %p105 = por %p103, %p104
    %s106 = ssub.s32 %s16, %s28
    %s107 = ssub.s32 %s17, %s24
    %s108 = sor.u32 %s106, %s107
    %p109 = scmp.eq.s32.totalorder %s108, 0
    %s111 = sadd.s32 %s110, 1
    %s112 = scalar_select %p109, %s110, %s111
    %p115 = pneg %p109
    %p116 = scmp.eq.s32.totalorder %s9, 1
    %p117 = por %p115, %p116
    %p118 = scmp.ne.s32.totalorder %s110, %s113
    %p119 = scmp.eq.s32.totalorder %s9, 0
    %p120 = por %p118, %p119
    %p121 = scmp.ne.s32.totalorder %s110, %s113
    %p122 = scmp.eq.s32.totalorder %s14, 1
    %p123 = por %p121, %p122
    %p124 = scmp.ne.s32.totalorder %s113, %s114
    %p125 = scmp.eq.s32.totalorder %s14, 0
    %p126 = por %p124, %p125
    %p127 = scmp.ne.s32.totalorder %s113, %s114
    %p128 = scmp.eq.s32.totalorder %s15, 1
    %p129 = por %p127, %p128
    %p131 = scmp.ne.s32.totalorder %s114, %s130
    %p132 = scmp.eq.s32.totalorder %s15, 0
    %p133 = por %p131, %p132
    %p134 = scmp.le.s32.totalorder 1, %s9
    %p135 = scmp.lt.s32.totalorder %s9, 3
    %p136 = pnand %p134, %p135
    %p137 = pneg %p136
    // Predicated region
    $region9: #{model_forward.1} parent=5 // pred_check
      _
    $region10: #{model_forward.1} parent=5 // pred_check_branch
      %139 = sbr.rel (%p136) target = $region12
    $region11: #{model_forward.1} parent=5 // pred_region
      %s140 = ssub.s32 %s9, 1
      // Predicated region
      $region13: #{model_forward.1} parent=11 // pred_check
        %p141 = pneg %p42
      $region14: #{model_forward.1} parent=11 // pred_check_branch
        %143 = sbr.rel (%p141) target = $region16
      $region15: #{model_forward.1} parent=11 // pred_region
        _
      $region16: #{model_forward.1} parent=11 // pred_fallthru
        _
    $region12: #{model_forward.1} parent=5 // pred_fallthru
      _
    %p144 = scmp.lt.s32.totalorder %s9, 2
    // Predicated region
    $region17: #{model_forward.1} parent=5 // pred_check
      %p145 = pneg %p144
    $region18: #{model_forward.1} parent=5 // pred_check_branch
      %147 = sbr.rel (%p145) target = $region20
    $region19: #{model_forward.1} parent=5 // pred_region
      // Predicated region
      $region21: #{model_forward.1} parent=19 // pred_check
        %p148 = pneg %p64
      $region22: #{model_forward.1} parent=19 // pred_check_branch
        %150 = sbr.rel (%p148) target = $region24
      $region23: #{model_forward.1} parent=19 // pred_region
        %s151 = smul.u32 3, %s17
        %p152 = scmp.lt.s32.totalorder %s16, 1
        %s153 = scalar_select %p152, %s16, 1
        %p154 = scmp.lt.s32.totalorder %s151, 2
        %s155 = scalar_select %p154, %s151, 2
        %s156 = smul.addr %s153, 3
        %s157 = sadd.s32 %s155, %s156
        %s158 = smul.addr %s157, 4
        %s159 = scalar_lea.vmem %s1, %s158
        %s160 = smul.u32 3, %s17
      $region24: #{model_forward.1} parent=19 // pred_fallthru
        _
      // Predicated region
      $region25: #{model_forward.1} parent=19 // pred_check
        %p161 = pneg %p92
      $region26: #{model_forward.1} parent=19 // pred_check_branch
        %163 = sbr.rel (%p161) target = $region28
      $region27: #{model_forward.1} parent=19 // pred_region
        %s164 = smul.u32 3, %s17
        %p165 = scmp.lt.s32.totalorder %s16, 1
        %s166 = scalar_select %p165, %s16, 1
        %p167 = scmp.lt.s32.totalorder %s164, 2
        %s168 = scalar_select %p167, %s164, 2
        %s169 = smul.addr %s166, 3
        %s170 = sadd.s32 %s168, %s169
        %s171 = smul.addr %s170, 4
        %s172 = scalar_lea.vmem %s2, %s171
        %s173 = smul.u32 3, %s17
      $region28: #{model_forward.1} parent=19 // pred_fallthru
        _
    $region20: #{model_forward.1} parent=5 // pred_fallthru
      _
    %p174 = scmp.le.s32.totalorder 1, %s9
    %p175 = scmp.lt.s32.totalorder %s9, 3
    %p176 = pnand %p174, %p175
    %p177 = pneg %p176
    // Predicated region
    $region29: #{model_forward.1} parent=5 // pred_check
      _
    $region30: #{model_forward.1} parent=5 // pred_check_branch
      %179 = sbr.rel (%p176) target = $region32
    $region31: #{model_forward.1} parent=5 // pred_region
      %s180 = ssub.s32 %s9, 1
      %p181 = pneg %p42
      %p182 = pneg %p39
      %s183 = smul.u32 3, %s19
      %p184 = scmp.lt.s32.totalorder %s18, 1
      %s185 = scalar_select %p184, %s18, 1
      %p186 = scmp.lt.s32.totalorder %s183, 2
      %s187 = scalar_select %p186, %s183, 2
      %s188 = smul.addr %s185, 3
      %s189 = sadd.s32 %s187, %s188
      %s190 = smul.addr %s189, 4
      %s191 = scalar_lea.vmem %s1, %s190
      %p192 = pneg %p70
      %p193 = pneg %p67
      %s194 = smul.u32 3, %s19
      %p195 = scmp.lt.s32.totalorder %s18, 1
      %s196 = scalar_select %p195, %s18, 1
      %p197 = scmp.lt.s32.totalorder %s194, 2
      %s198 = scalar_select %p197, %s194, 2
      %s199 = smul.addr %s196, 3
      %s200 = sadd.s32 %s198, %s199
      %s201 = smul.addr %s200, 4
      %s202 = scalar_lea.vmem %s2, %s201
      %p203 = pneg %p98
      %p204 = pneg %p95
      %p205 = pneg %p126
      %p206 = pneg %p123
      %s207 = smul.u32 3, %s19
      %p208 = scmp.lt.s32.totalorder %s18, 1
      %s209 = scalar_select %p208, %s18, 1
      %p210 = scmp.lt.s32.totalorder %s207, 2
      %s211 = scalar_select %p210, %s207, 2
      %s212 = smul.addr %s209, 3
      %s213 = sadd.s32 %s211, %s212
      %s214 = smul.addr %s213, 8
      %s215 = scalar_lea.vmem %s3, %s214
      %s216 = smul.u32 3, %s19
      %p217 = scmp.lt.s32.totalorder %s18, 1
      %s218 = scalar_select %p217, %s18, 1
      %p219 = scmp.lt.s32.totalorder %s216, 2
      %s220 = scalar_select %p219, %s216, 2
      %s221 = smul.addr %s218, 3
      %s222 = sadd.s32 %s220, %s221
      %s223 = smul.addr %s222, 4
      %s224 = scalar_lea.vmem %s1, %s223
      %s225 = smul.u32 3, %s19
      %s226 = smul.u32 3, %s19
      %p227 = scmp.lt.s32.totalorder %s18, 1
      %s228 = scalar_select %p227, %s18, 1
      %p229 = scmp.lt.s32.totalorder %s226, 2
      %s230 = scalar_select %p229, %s226, 2
      %s231 = smul.addr %s228, 3
      %s232 = sadd.s32 %s230, %s231
      %s233 = smul.addr %s232, 4
      %s234 = scalar_lea.vmem %s2, %s233
      %s235 = smul.u32 3, %s19
      %s236 = smul.u32 3, %s19
      %p237 = scmp.lt.s32.totalorder %s18, 1
      %s238 = scalar_select %p237, %s18, 1
      %p239 = scmp.lt.s32.totalorder %s236, 2
      %s240 = scalar_select %p239, %s236, 2
      %s241 = smul.addr %s238, 3
      %s242 = sadd.s32 %s240, %s241
      %s243 = smul.addr %s242, 8
      %s244 = scalar_lea.vmem %s3, %s243
      %s245 = smul.u32 3, %s19
      %v246 = vld [vmem:[%s0] sm:$0xff]
      %v247 = vld [vmem:[%s224] sm:$0x77]
      %v248 = vld [vmem:[%s224 + $0x8] sm:$0x7]
      %v249 = vld [vmem:[%s234] sm:$0x77]
      %v250 = vld [vmem:[%s234 + $0x8] sm:$0x7]
      %252 = vset.pattern.permute.xlu0 0
      %253 = vperm.xlu0 %252, %v246
      %v254 = vpop.permute.xlu0 %253
      %v258 = vlaneseq
      %v259 = vshrl.u32 %v258, 7
      %v260 = vsub.s32 0, %v259
      %v261 = vrot.slane %v247, %v260
      %v262 = vlaneseq
      %v263 = vshrl.u32 %v262, 7
      %v264 = vsub.s32 4, %v263
      %v265 = vrot.slane %v247, %v264
      %v266 = vlaneseq
      %v267 = vshrl.u32 %v266, 7
      %v268 = vsub.s32 0, %v267
      %v269 = vrot.slane %v248, %v268
      %v273 = vlaneseq
      %v274 = vshrl.u32 %v273, 7
      %v275 = vsub.s32 0, %v274
      %v276 = vrot.slane %v261, %v275
      %v277 = vlaneseq
      %v278 = vshrl.u32 %v277, 7
      %v279 = vsub.s32 0, %v278
      %v280 = vrot.slane %v265, %v279
      %v281 = vlaneseq
      %v282 = vshrl.u32 %v281, 7
      %v283 = vsub.s32 0, %v282
      %v284 = vrot.slane %v269, %v283
      %v285 = vmul.f32 %v254, %v276
      %v286 = vmul.f32 %v254, %v280
      %v287 = vmul.f32 %v254, %v284
      %288 = vset.pattern.permute.xlu0 4
      %289 = vperm.xlu0 %288, %v246
      %v290 = vpop.permute.xlu0 %289
      %v294 = vlaneseq
      %v295 = vshrl.u32 %v294, 7
      %v296 = vsub.s32 0, %v295
      %v297 = vrot.slane %v249, %v296
      %v298 = vlaneseq
      %v299 = vshrl.u32 %v298, 7
      %v300 = vsub.s32 4, %v299
      %v301 = vrot.slane %v249, %v300
      %v302 = vlaneseq
      %v303 = vshrl.u32 %v302, 7
      %v304 = vsub.s32 0, %v303
      %v305 = vrot.slane %v250, %v304
      %v309 = vlaneseq
      %v310 = vshrl.u32 %v309, 7
      %v311 = vsub.s32 0, %v310
      %v312 = vrot.slane %v297, %v311
      %v313 = vlaneseq
      %v314 = vshrl.u32 %v313, 7
      %v315 = vsub.s32 0, %v314
      %v316 = vrot.slane %v301, %v315
      %v317 = vlaneseq
      %v318 = vshrl.u32 %v317, 7
      %v319 = vsub.s32 0, %v318
      %v320 = vrot.slane %v305, %v319
      %v321 = vmul.f32 %v290, %v312
      %v322 = vmul.f32 %v290, %v316
      %v323 = vmul.f32 %v290, %v320
      %324 = vset.pattern.permute.xlu0 1
      %325 = vperm.xlu0 %324, %v246
      %v326 = vpop.permute.xlu0 %325
      %v328 = vlaneseq
      %v329 = vshrl.u32 %v328, 7
      %v330 = vsub.s32 1, %v329
      %v331 = vrot.slane %v247, %v330
      %v332 = vlaneseq
      %v333 = vshrl.u32 %v332, 7
      %v334 = vsub.s32 5, %v333
      %v335 = vrot.slane %v247, %v334
      %v336 = vlaneseq
      %v337 = vshrl.u32 %v336, 7
      %v338 = vsub.s32 1, %v337
      %v339 = vrot.slane %v248, %v338
      %v343 = vlaneseq
      %v344 = vshrl.u32 %v343, 7
      %v345 = vsub.s32 1, %v344
      %v346 = vrot.slane %v331, %v345
      %v347 = vlaneseq
      %v348 = vshrl.u32 %v347, 7
      %v349 = vsub.s32 1, %v348
      %v350 = vrot.slane %v335, %v349
      %v351 = vlaneseq
      %v352 = vshrl.u32 %v351, 7
      %v353 = vsub.s32 1, %v352
      %v354 = vrot.slane %v339, %v353
      %v355 = vmul.f32 %v326, %v346
      %v356 = vmul.f32 %v326, %v350
      %v357 = vmul.f32 %v326, %v354
      %v358 = vadd.f32 %v285, %v355
      %v359 = vadd.f32 %v286, %v356
      %v360 = vadd.f32 %v287, %v357
      %361 = vset.pattern.permute.xlu0 5
      %362 = vperm.xlu0 %361, %v246
      %v363 = vpop.permute.xlu0 %362
      %v365 = vlaneseq
      %v366 = vshrl.u32 %v365, 7
      %v367 = vsub.s32 1, %v366
      %v368 = vrot.slane %v249, %v367
      %v369 = vlaneseq
      %v370 = vshrl.u32 %v369, 7
      %v371 = vsub.s32 5, %v370
      %v372 = vrot.slane %v249, %v371
      %v373 = vlaneseq
      %v374 = vshrl.u32 %v373, 7
      %v375 = vsub.s32 1, %v374
      %v376 = vrot.slane %v250, %v375
      %v380 = vlaneseq
      %v381 = vshrl.u32 %v380, 7
      %v382 = vsub.s32 1, %v381
      %v383 = vrot.slane %v368, %v382
      %v384 = vlaneseq
      %v385 = vshrl.u32 %v384, 7
      %v386 = vsub.s32 1, %v385
      %v387 = vrot.slane %v372, %v386
      %v388 = vlaneseq
      %v389 = vshrl.u32 %v388, 7
      %v390 = vsub.s32 1, %v389
      %v391 = vrot.slane %v376, %v390
      %v392 = vmul.f32 %v363, %v383
      %v393 = vmul.f32 %v363, %v387
      %v394 = vmul.f32 %v363, %v391
      %v395 = vadd.f32 %v321, %v392
      %v396 = vadd.f32 %v322, %v393
      %v397 = vadd.f32 %v323, %v394
      %398 = vset.pattern.permute.xlu0 2
      %399 = vperm.xlu0 %398, %v246
      %v400 = vpop.permute.xlu0 %399
      %v402 = vlaneseq
      %v403 = vshrl.u32 %v402, 7
      %v404 = vsub.s32 2, %v403
      %v405 = vrot.slane %v247, %v404
      %v406 = vlaneseq
      %v407 = vshrl.u32 %v406, 7
      %v408 = vsub.s32 6, %v407
      %v409 = vrot.slane %v247, %v408
      %v410 = vlaneseq
      %v411 = vshrl.u32 %v410, 7
      %v412 = vsub.s32 2, %v411
      %v413 = vrot.slane %v248, %v412
      %v417 = vlaneseq
      %v418 = vshrl.u32 %v417, 7
      %v419 = vsub.s32 2, %v418
      %v420 = vrot.slane %v405, %v419
      %v421 = vlaneseq
      %v422 = vshrl.u32 %v421, 7
      %v423 = vsub.s32 2, %v422
      %v424 = vrot.slane %v409, %v423
      %v425 = vlaneseq
      %v426 = vshrl.u32 %v425, 7
      %v427 = vsub.s32 2, %v426
      %v428 = vrot.slane %v413, %v427
      %v429 = vmul.f32 %v400, %v420
      %v430 = vmul.f32 %v400, %v424
      %v431 = vmul.f32 %v400, %v428
      %v432 = vadd.f32 %v358, %v429
      %v433 = vadd.f32 %v359, %v430
      %v434 = vadd.f32 %v360, %v431
      %435 = vset.pattern.permute.xlu0 6
      %436 = vperm.xlu0 %435, %v246
      %v437 = vpop.permute.xlu0 %436
      %v439 = vlaneseq
      %v440 = vshrl.u32 %v439, 7
      %v441 = vsub.s32 2, %v440
      %v442 = vrot.slane %v249, %v441
      %v443 = vlaneseq
      %v444 = vshrl.u32 %v443, 7
      %v445 = vsub.s32 6, %v444
      %v446 = vrot.slane %v249, %v445
      %v447 = vlaneseq
      %v448 = vshrl.u32 %v447, 7
      %v449 = vsub.s32 2, %v448
      %v450 = vrot.slane %v250, %v449
      %v454 = vlaneseq
      %v455 = vshrl.u32 %v454, 7
      %v456 = vsub.s32 2, %v455
      %v457 = vrot.slane %v442, %v456
      %v458 = vlaneseq
      %v459 = vshrl.u32 %v458, 7
      %v460 = vsub.s32 2, %v459
      %v461 = vrot.slane %v446, %v460
      %v462 = vlaneseq
      %v463 = vshrl.u32 %v462, 7
      %v464 = vsub.s32 2, %v463
      %v465 = vrot.slane %v450, %v464
      %v466 = vmul.f32 %v437, %v457
      %v467 = vmul.f32 %v437, %v461
      %v468 = vmul.f32 %v437, %v465
      %v469 = vadd.f32 %v395, %v466
      %v470 = vadd.f32 %v396, %v467
      %v471 = vadd.f32 %v397, %v468
      %472 = vset.pattern.permute.xlu0 3
      %473 = vperm.xlu0 %472, %v246
      %v474 = vpop.permute.xlu0 %473
      %v476 = vadd.f32 %v432, %v474
      %v477 = vadd.f32 %v433, %v474
      %v478 = vadd.f32 %v434, %v474
      %479 = vset.pattern.permute.xlu0 7
      %480 = vperm.xlu0 %479, %v246
      %v481 = vpop.permute.xlu0 %480
      %v483 = vadd.f32 %v469, %v481
      %v484 = vadd.f32 %v470, %v481
      %v485 = vadd.f32 %v471, %v481
      %v486 = vmul.f32 %v476, %v483
      %v487 = vmul.f32 %v477, %v484
      %v488 = vmul.f32 %v478, %v485
      %489 = vst [vmem:[%s244] sm:$0xff] %v486
      %490 = vst [vmem:[%s244 + $0x8] sm:$0xff] %v487
      %vm491 = vcmask 556032
      %492 = vst.msk [vmem:[%s244 + $0x10] sm:$0xff] %vm491, %v488
      %s493 = smul.u32 3, %s19
      %p494 = scmp.lt.s32.totalorder %s18, 1
      %s495 = scalar_select %p494, %s18, 1
      %p496 = scmp.lt.s32.totalorder %s493, 2
      %s497 = scalar_select %p496, %s493, 2
      %s498 = smul.addr %s495, 3
      %s499 = sadd.s32 %s497, %s498
      %s500 = smul.addr %s499, 8
      %s501 = scalar_lea.vmem %s3, %s500
      // Predicated region
      $region33: #{model_forward.1} parent=31 // pred_check
        %p502 = pneg %p123
      $region34: #{model_forward.1} parent=31 // pred_check_branch
        %504 = sbr.rel (%p502) target = $region36
      $region35: #{model_forward.1} parent=31 // pred_region
        %s505 = smul.u32 3, %s19
      $region36: #{model_forward.1} parent=31 // pred_fallthru
        _
    $region32: #{model_forward.1} parent=5 // pred_fallthru
      _
    %p506 = scmp.le.s32.totalorder 2, %s9
    // Predicated region
    $region37: #{model_forward.1} parent=5 // pred_check
      %p507 = pneg %p506
    $region38: #{model_forward.1} parent=5 // pred_check_branch
      %509 = sbr.rel (%p507) target = $region40
    $region39: #{model_forward.1} parent=5 // pred_region
      %s510 = ssub.s32 %s9, 2
      // Predicated region
      $region41: #{model_forward.1} parent=39 // pred_check
        %p511 = pneg %p129
      $region42: #{model_forward.1} parent=39 // pred_check_branch
        %513 = sbr.rel (%p511) target = $region44
      $region43: #{model_forward.1} parent=39 // pred_region
        %s514 = smul.u32 3, %s21
        %p515 = scmp.lt.s32.totalorder %s20, 1
        %s516 = scalar_select %p515, %s20, 1
        %p517 = scmp.lt.s32.totalorder %s514, 2
        %s518 = scalar_select %p517, %s514, 2
        %s519 = smul.addr %s516, 3
        %s520 = sadd.s32 %s518, %s519
        %s521 = smul.addr %s520, 8
        %s522 = scalar_lea.vmem %s3, %s521
      $region44: #{model_forward.1} parent=39 // pred_fallthru
        _
    $region40: #{model_forward.1} parent=5 // pred_fallthru
      _
  $region6: #{model_forward.1} parent=0 // loop_footer
    %s13 = sadd.s32 1, %s9
  $region7: #{model_forward.1} parent=0 // loop_footer_branch
    %8 = sbr.rel target = $region3
  $region8: #{model_forward.1} parent=0 // loop_exit
    _

</llo_original>
